<compile_context>
chip_gen: v6e
topology: v6e:2x2x1
jax: 0.10.0
libtpu: 0.0.40
codegen_flags: <defaults>
</compile_context>

<pallas_src>
import functools

import jax
import jax.numpy as jnp
from jax import lax
from jax.experimental import pallas as pl
from jax.experimental.pallas import tpu as pltpu


def _flash_sdpa_kernel(q_ref, k_ref, v_ref, o_ref, m_sc, l_sc, acc_sc, *, scale):
    kv = pl.program_id(2)

    @pl.when(kv == 0)
    def _init():
        m_sc[...] = jnp.full_like(m_sc, -jnp.inf)
        l_sc[...] = jnp.zeros_like(l_sc)
        acc_sc[...] = jnp.zeros_like(acc_sc)

    q = q_ref[0]                      # (tq, D)
    if scale is not None:
        q = q * scale                 # fold scale into Q: tq*D work, not tq*tk
    k = k_ref[0]                      # (tk, D)
    v = v_ref[0]                      # (tk, D)

    # scores = q @ k^T, contracting the feature axis directly (no K transpose).
    s = lax.dot_general(q, k, (((1,), (1,)), ((), ())),
                        preferred_element_type=jnp.float32)   # (tq, tk) f32

    # Online (streaming) softmax over kv tiles.
    m_prev = m_sc[...]                                         # (tq, 1)
    m_new = jnp.maximum(m_prev, jnp.max(s, axis=-1, keepdims=True))
    alpha = jnp.exp(m_prev - m_new)
    p = jnp.exp(s - m_new)                                     # unnormalized probs

    l_sc[...] = alpha * l_sc[...] + jnp.sum(p, axis=-1, keepdims=True)
    acc_sc[...] = alpha * acc_sc[...] + jnp.dot(
        p.astype(v.dtype), v, preferred_element_type=jnp.float32)
    m_sc[...] = m_new

    @pl.when(kv == pl.num_programs(2) - 1)
    def _finalize():
        # Normalize once on the (tq, D) accumulator instead of on score tiles.
        inv = pl.reciprocal(l_sc[...], approx=False)
        o_ref[0] = (acc_sc[...] * inv).astype(o_ref.dtype)


def _choose_tile(L, preferred):
    """Largest MXU/lane-friendly tile that divides L (or the full L)."""
    if L <= preferred:
        return L
    for t in sorted({preferred, 512, 256, 128}, reverse=True):
        if t <= preferred and L % t == 0:
            return t
    # No aligned divisor of L: fall back to a single full-length tile.
    return L


def scaled_dot_product_attention(Q, K, V, scale=None, *, tq=256, tk=256):
    """Pallas TPU implementation of Scaled_Dot_Product_Attention.forward.

    Q, K, V: (B, L, D) arrays (same dtype). Returns context of shape (B, L, D).
    `scale` follows PyTorch truthiness: None or 0 means no scaling.
    """
    B, L, D = Q.shape
    assert K.shape == (B, L, D) and V.shape == (B, L, D)

    # Mirror `if scale:` from the PyTorch code (0 / None -> no scaling).
    eff_scale = float(scale) if scale else None

    # Pad the feature dim to a multiple of 128 (lane-dense output stores, full
    # MXU columns).  Exact: zero features add 0 to Q@K^T and yield zero output
    # columns, which we slice off afterwards.
    Dp = ((D + 127) // 128) * 128 if D % 128 != 0 else D
    if Dp != D:
        pad = ((0, 0), (0, 0), (0, Dp - D))
        Qp, Kp, Vp = jnp.pad(Q, pad), jnp.pad(K, pad), jnp.pad(V, pad)
    else:
        Qp, Kp, Vp = Q, K, V

    tq = _choose_tile(L, tq)
    tk = _choose_tile(L, tk)
    nq, nk = L // tq, L // tk

    kernel = functools.partial(_flash_sdpa_kernel, scale=eff_scale)

    q_spec = pl.BlockSpec((1, tq, Dp), lambda b, qi, ki: (b, qi, 0))
    k_spec = pl.BlockSpec((1, tk, Dp), lambda b, qi, ki: (b, ki, 0))
    v_spec = pl.BlockSpec((1, tk, Dp), lambda b, qi, ki: (b, ki, 0))
    o_spec = pl.BlockSpec((1, tq, Dp), lambda b, qi, ki: (b, qi, 0))

    itemsize = jnp.dtype(Qp.dtype).itemsize
    cost = pl.CostEstimate(
        flops=4 * B * L * L * Dp,                      # two matmuls
        transcendentals=B * L * L,                     # exp
        bytes_accessed=(2 + 2 * nq) * B * L * Dp * itemsize,
    )

    out = pl.pallas_call(
        kernel,
        out_shape=jax.ShapeDtypeStruct((B, L, Dp), Q.dtype),
        grid_spec=pltpu.PrefetchScalarGridSpec(
            num_scalar_prefetch=0,
            grid=(B, nq, nk),
            in_specs=[q_spec, k_spec, v_spec],
            out_specs=o_spec,
            scratch_shapes=[
                pltpu.VMEM((tq, 1), jnp.float32),      # running max m
                pltpu.VMEM((tq, 1), jnp.float32),      # running denom l
                pltpu.VMEM((tq, Dp), jnp.float32),     # running accumulator
            ],
        ),
        compiler_params=pltpu.CompilerParams(
            dimension_semantics=("parallel", "parallel", "arbitrary"),
            vmem_limit_bytes=48 * 1024 * 1024,         # sized for v7x's 64 MiB VMEM
        ),
        cost_estimate=cost,
    )(Qp, Kp, Vp)

    if Dp != D:
        out = out[:, :, :D]
    return out


def _reference(Q, K, V, scale=None):
    # Pure-JAX reference matching the PyTorch forward exactly.
    attn = jnp.einsum("bld,bmd->blm", Q, K)
    if scale:
        attn = attn * scale
    attn = jax.nn.softmax(attn, axis=-1)
    return jnp.einsum("blm,bmd->bld", attn, V)


if __name__ == "__main__":
    # Small shapes consistent with the module's forward: batch=2, seq=8, hidden=32.
    B, L, D = 2, 8, 32
    key = jax.random.PRNGKey(0)
    kq, kk, kv = jax.random.split(key, 3)
    Q = jax.random.normal(kq, (B, L, D), dtype=jnp.float32)
    K = jax.random.normal(kk, (B, L, D), dtype=jnp.float32)
    V = jax.random.normal(kv, (B, L, D), dtype=jnp.float32)
    scale = 1.0 / (D ** 0.5)

    out = jax.block_until_ready(scaled_dot_product_attention(Q, K, V, scale=scale))
    ref = _reference(Q, K, V, scale=scale)
    assert out.shape == (B, L, D)
    assert jnp.allclose(out, ref, atol=1e-5, rtol=1e-5), "mismatch vs reference"

    # Also exercise the scale=None branch (PyTorch `if scale:` falsy path).
    out2 = jax.block_until_ready(scaled_dot_product_attention(Q, K, V, scale=None))
    ref2 = _reference(Q, K, V, scale=None)
    assert jnp.allclose(out2, ref2, atol=1e-5, rtol=1e-5), "mismatch (no scale)"

    # Exercise the tiled online-softmax path (multiple q and kv tiles).
    B2, L2, D2 = 1, 256, 128
    kq2, kk2, kv2 = jax.random.split(jax.random.PRNGKey(1), 3)
    Q2 = jax.random.normal(kq2, (B2, L2, D2), dtype=jnp.float32)
    K2 = jax.random.normal(kk2, (B2, L2, D2), dtype=jnp.float32)
    V2 = jax.random.normal(kv2, (B2, L2, D2), dtype=jnp.float32)
    s2 = 1.0 / (D2 ** 0.5)
    out3 = jax.block_until_ready(
        scaled_dot_product_attention(Q2, K2, V2, scale=s2, tq=128, tk=128))
    ref3 = _reference(Q2, K2, V2, scale=s2)
    assert jnp.allclose(out3, ref3, atol=1e-4, rtol=1e-4), "mismatch (tiled path)"

    print("KERNEL_OK")
</pallas_src>

<mosaic_0001>
module attributes {stable_mosaic.version = 11 : i64} {
  func.func @_flash_sdpa_kernel(%arg0: i32, %arg1: i32, %arg2: i32, %arg3: memref<1x8x128xf32, #tpu.memory_space<vmem>>, %arg4: memref<1x8x128xf32, #tpu.memory_space<vmem>>, %arg5: memref<1x8x128xf32, #tpu.memory_space<vmem>>, %arg6: memref<1x8x128xf32, #tpu.memory_space<vmem>>, %arg7: memref<8x1xf32, #tpu.memory_space<vmem>>, %arg8: memref<8x1xf32, #tpu.memory_space<vmem>>, %arg9: memref<8x128xf32, #tpu.memory_space<vmem>>) attributes {dimension_semantics = [#tpu.dimension_semantics<parallel>, #tpu.dimension_semantics<parallel>, #tpu.dimension_semantics<arbitrary>], iteration_bounds = array<i64: 2, 1, 1>, scalar_prefetch = 0 : i64, scratch_operands = 3 : i64, tpu.core_type = #tpu.core_type<tc>, window_params = [{transform_indices = @transform_0, window_bounds = array<i64: 1, 8, 128>}, {transform_indices = @transform_1, window_bounds = array<i64: 1, 8, 128>}, {transform_indices = @transform_2, window_bounds = array<i64: 1, 8, 128>}, {transform_indices = @transform_3, window_bounds = array<i64: 1, 8, 128>}]} {
    %c0_i32 = arith.constant 0 : i32
    %0 = arith.cmpi eq, %arg2, %c0_i32 : i32
    %1 = arith.extui %0 : i1 to i32
    %c0_i32_0 = arith.constant 0 : i32
    %2 = arith.cmpi ne, %1, %c0_i32_0 : i32
    scf.if %2 {
      %cst_27 = arith.constant 0xFF800000 : f32
      %37 = vector.broadcast %cst_27 : f32 to vector<8x1xf32>
      %c0_28 = arith.constant 0 : index
      %c0_29 = arith.constant 0 : index
      %38 = vector.load %arg7[%c0_28, %c0_29] : memref<8x1xf32, #tpu.memory_space<vmem>>, vector<8x1xf32>
      tpu.vector_store %arg7[%c0_28, %c0_29], %37 {strides = array<i32>} : memref<8x1xf32, #tpu.memory_space<vmem>>, vector<8x1xf32>,
      %cst_30 = arith.constant 0.000000e+00 : f32
      %39 = vector.broadcast %cst_30 : f32 to vector<8x1xf32>
      %c0_31 = arith.constant 0 : index
      %c0_32 = arith.constant 0 : index
      %40 = vector.load %arg8[%c0_31, %c0_32] : memref<8x1xf32, #tpu.memory_space<vmem>>, vector<8x1xf32>
      tpu.vector_store %arg8[%c0_31, %c0_32], %39 {strides = array<i32>} : memref<8x1xf32, #tpu.memory_space<vmem>>, vector<8x1xf32>,
      %cst_33 = arith.constant 0.000000e+00 : f32
      %41 = vector.broadcast %cst_33 : f32 to vector<8x128xf32>
      %c0_34 = arith.constant 0 : index
      %c0_35 = arith.constant 0 : index
      %42 = vector.load %arg9[%c0_34, %c0_35] : memref<8x128xf32, #tpu.memory_space<vmem>>, vector<8x128xf32>
      tpu.vector_store %arg9[%c0_34, %c0_35], %41 {strides = array<i32>} : memref<8x128xf32, #tpu.memory_space<vmem>>, vector<8x128xf32>,
    } else {
    }
    %c0 = arith.constant 0 : index
    %c0_1 = arith.constant 0 : index
    %c0_2 = arith.constant 0 : index
    %3 = vector.load %arg3[%c0, %c0_1, %c0_2] : memref<1x8x128xf32, #tpu.memory_space<vmem>>, vector<1x8x128xf32>
    %4 = vector.shape_cast %3 : vector<1x8x128xf32> to vector<8x128xf32>
    %cst = arith.constant 0.176776692 : f32
    %5 = vector.broadcast %cst : f32 to vector<8x128xf32>
    %6 = arith.mulf %4, %5 : vector<8x128xf32>
    %c0_3 = arith.constant 0 : index
    %c0_4 = arith.constant 0 : index
    %c0_5 = arith.constant 0 : index
    %7 = vector.load %arg4[%c0_3, %c0_4, %c0_5] : memref<1x8x128xf32, #tpu.memory_space<vmem>>, vector<1x8x128xf32>
    %8 = vector.shape_cast %7 : vector<1x8x128xf32> to vector<8x128xf32>
    %c0_6 = arith.constant 0 : index
    %c0_7 = arith.constant 0 : index
    %c0_8 = arith.constant 0 : index
    %9 = vector.load %arg5[%c0_6, %c0_7, %c0_8] : memref<1x8x128xf32, #tpu.memory_space<vmem>>, vector<1x8x128xf32>
    %10 = vector.shape_cast %9 : vector<1x8x128xf32> to vector<8x128xf32>
    %cst_9 = arith.constant dense<0.000000e+00> : vector<8x8xf32>
    %11 = tpu.matmul %6, %8, %cst_9 {dimension_numbers = #tpu.dot_dimension_numbers<[1], [1], [0], [0], [0, 0, 1, 0], [], []>} : vector<8x128xf32>, vector<8x128xf32>, vector<8x8xf32> -> vector<8x8xf32>
    %c0_10 = arith.constant 0 : index
    %c0_11 = arith.constant 0 : index
    %12 = vector.load %arg7[%c0_10, %c0_11] : memref<8x1xf32, #tpu.memory_space<vmem>>, vector<8x1xf32>
    %cst_12 = arith.constant dense<0xFF800000> : vector<8xf32>
    %13 = vector.multi_reduction <maximumf>, %11, %cst_12 [1] : vector<8x8xf32> to vector<8xf32>
    %14 = vector.shape_cast %13 : vector<8xf32> to vector<8x1xf32>
    %15 = arith.maximumf %12, %14 : vector<8x1xf32>
    %16 = arith.subf %12, %15 : vector<8x1xf32>
    %17 = math.exp %16 : vector<8x1xf32>
    %18 = vector.broadcast %15 : vector<8x1xf32> to vector<8x8xf32>
    %19 = arith.subf %11, %18 : vector<8x8xf32>
    %20 = math.exp %19 : vector<8x8xf32>
    %c0_13 = arith.constant 0 : index
    %c0_14 = arith.constant 0 : index
    %21 = vector.load %arg8[%c0_13, %c0_14] : memref<8x1xf32, #tpu.memory_space<vmem>>, vector<8x1xf32>
    %22 = arith.mulf %17, %21 : vector<8x1xf32>
    %cst_15 = arith.constant dense<0.000000e+00> : vector<8xf32>
    %23 = vector.multi_reduction <add>, %20, %cst_15 [1] : vector<8x8xf32> to vector<8xf32>
    %24 = vector.shape_cast %23 : vector<8xf32> to vector<8x1xf32>
    %25 = arith.addf %22, %24 : vector<8x1xf32>
    %c0_16 = arith.constant 0 : index
    %c0_17 = arith.constant 0 : index
    %26 = vector.load %arg8[%c0_16, %c0_17] : memref<8x1xf32, #tpu.memory_space<vmem>>, vector<8x1xf32>
    tpu.vector_store %arg8[%c0_16, %c0_17], %25 {strides = array<i32>} : memref<8x1xf32, #tpu.memory_space<vmem>>, vector<8x1xf32>,
    %c0_18 = arith.constant 0 : index
    %c0_19 = arith.constant 0 : index
    %27 = vector.load %arg9[%c0_18, %c0_19] : memref<8x128xf32, #tpu.memory_space<vmem>>, vector<8x128xf32>
    %28 = vector.broadcast %17 : vector<8x1xf32> to vector<8x128xf32>
    %29 = arith.mulf %28, %27 : vector<8x128xf32>
    %cst_20 = arith.constant dense<0.000000e+00> : vector<8x128xf32>
    %30 = tpu.matmul %20, %10, %cst_20 {dimension_numbers = #tpu.dot_dimension_numbers<[1], [0], [0], [1], [0, 0, 1, 1], [], []>} : vector<8x8xf32>, vector<8x128xf32>, vector<8x128xf32> -> vector<8x128xf32>
    %31 = arith.addf %29, %30 : vector<8x128xf32>
    %c0_21 = arith.constant 0 : index
    %c0_22 = arith.constant 0 : index
    %32 = vector.load %arg9[%c0_21, %c0_22] : memref<8x128xf32, #tpu.memory_space<vmem>>, vector<8x128xf32>
    tpu.vector_store %arg9[%c0_21, %c0_22], %31 {strides = array<i32>} : memref<8x128xf32, #tpu.memory_space<vmem>>, vector<8x128xf32>,
    %c0_23 = arith.constant 0 : index
    %c0_24 = arith.constant 0 : index
    %33 = vector.load %arg7[%c0_23, %c0_24] : memref<8x1xf32, #tpu.memory_space<vmem>>, vector<8x1xf32>
    tpu.vector_store %arg7[%c0_23, %c0_24], %15 {strides = array<i32>} : memref<8x1xf32, #tpu.memory_space<vmem>>, vector<8x1xf32>,
    %c0_i32_25 = arith.constant 0 : i32
    %34 = arith.cmpi eq, %arg2, %c0_i32_25 : i32
    %35 = arith.extui %34 : i1 to i32
    %c0_i32_26 = arith.constant 0 : i32
    %36 = arith.cmpi ne, %35, %c0_i32_26 : i32
    scf.if %36 {
      %c0_27 = arith.constant 0 : index
      %c0_28 = arith.constant 0 : index
      %37 = vector.load %arg8[%c0_27, %c0_28] : memref<8x1xf32, #tpu.memory_space<vmem>>, vector<8x1xf32>
      %38 = tpu.reciprocal %37 : vector<8x1xf32> -> vector<8x1xf32>
      %c0_29 = arith.constant 0 : index
      %c0_30 = arith.constant 0 : index
      %39 = vector.load %arg9[%c0_29, %c0_30] : memref<8x128xf32, #tpu.memory_space<vmem>>, vector<8x128xf32>
      %40 = vector.broadcast %38 : vector<8x1xf32> to vector<8x128xf32>
      %41 = arith.mulf %39, %40 : vector<8x128xf32>
      %c0_31 = arith.constant 0 : index
      %c0_32 = arith.constant 0 : index
      %c0_33 = arith.constant 0 : index
      %42 = vector.load %arg6[%c0_31, %c0_32, %c0_33] : memref<1x8x128xf32, #tpu.memory_space<vmem>>, vector<1x8x128xf32>
      %43 = vector.shape_cast %42 : vector<1x8x128xf32> to vector<8x128xf32>
      %44 = vector.shape_cast %41 : vector<8x128xf32> to vector<1x8x128xf32>
      tpu.vector_store %arg6[%c0_31, %c0_32, %c0_33], %44 {strides = array<i32>} : memref<1x8x128xf32, #tpu.memory_space<vmem>>, vector<1x8x128xf32>,
    } else {
    }
    return
  }
  func.func @transform_0(%arg0: i32, %arg1: i32, %arg2: i32) -> (i32, i32, i32) {
    %c0_i32 = arith.constant 0 : i32
    %c0_i32_0 = arith.constant 0 : i32
    return %arg0, %arg1, %c0_i32 : i32, i32, i32
  }
  func.func @transform_1(%arg0: i32, %arg1: i32, %arg2: i32) -> (i32, i32, i32) {
    %c0_i32 = arith.constant 0 : i32
    %c0_i32_0 = arith.constant 0 : i32
    return %arg0, %arg2, %c0_i32 : i32, i32, i32
  }
  func.func @transform_2(%arg0: i32, %arg1: i32, %arg2: i32) -> (i32, i32, i32) {
    %c0_i32 = arith.constant 0 : i32
    %c0_i32_0 = arith.constant 0 : i32
    return %arg0, %arg2, %c0_i32 : i32, i32, i32
  }
  func.func @transform_3(%arg0: i32, %arg1: i32, %arg2: i32) -> (i32, i32, i32) {
    %c0_i32 = arith.constant 0 : i32
    %c0_i32_0 = arith.constant 0 : i32
    return %arg0, %arg1, %c0_i32 : i32, i32, i32
  }
}

</mosaic_0001>

<llo_original>
// kernel: tpu_custom_call.1
$region0: #{tpu_custom_call.1}
  #allocation0 [shape = 'u32[]', space=smem, size = 0x4, offset = 0x4, fixed_abs, tag = 'smem constant byte address 0x4 - core index']
  #allocation1 [shape = 'u32[144,128]{1,0:T(1,128)}', space=vmem, size = 0x12000, scoped, tag = 'internal scratch']
  #allocation2 [shape = 'f32[8,1]{1,0:T(8,128)}', space=vmem, size = 0x1000, scoped, tag = 'scratch operand']
  #allocation3 [shape = 'f32[8,1]{1,0:T(8,128)}', space=vmem, size = 0x1000, scoped, tag = 'scratch operand']
  #allocation4 [shape = 'f32[8,128]{1,0:T(8,128)}', space=vmem, size = 0x1000, scoped, tag = 'scratch operand']
  %s0 = inlined_call_operand.hbm [shape: f32[2,8,128], index: 0, kind: input, shape index: {}]
  %s1 = inlined_call_operand.hbm [shape: f32[2,8,128], index: 1, kind: input, shape index: {}]
  %s2 = inlined_call_operand.hbm [shape: f32[2,8,128], index: 2, kind: input, shape index: {}]
  %s3 = inlined_call_operand.hbm [shape: f32[2,8,128], index: 3, kind: output, shape index: {}]
  %s4 = sld [smem:[#allocation0]]
  $region65: #{tpu_custom_call.1} parent=0
    _
  %s6 = ssub.s32 1, %s4
  %s7 = scalar_select 0, %s6, %s4
  $region1: #{tpu_custom_call.1} parent=0
    #allocation5 [shape = 'u8[8192]{0}', space=vmem, size = 0x2000, scoped, tag = 'input window, operand 0']
    #allocation6 [shape = 's32[2]{0}', space=sflag, size = 0x8, scoped, tag = 'scoped memory for tpu_custom_call.1']
    #allocation7 [shape = 's32[2]{0}', space=sflag, size = 0x8, scoped, tag = 'scoped memory for tpu_custom_call.1']
    #allocation8 [shape = 'u8[8192]{0}', space=vmem, size = 0x2000, scoped, tag = 'input window, operand 1']
    #allocation9 [shape = 's32[2]{0}', space=sflag, size = 0x8, scoped, tag = 'scoped memory for tpu_custom_call.1']
    #allocation10 [shape = 'u8[8192]{0}', space=vmem, size = 0x2000, scoped, tag = 'input window, operand 2']
    #allocation11 [shape = 'u8[8192]{0}', space=vmem, size = 0x2000, scoped, tag = 'output window, operand 0']
    %8 = vsyncpa [#allocation6], 0
    %s9 = scalar_lea.sflag [#allocation6], 1
    %10 = vsyncpa %s9, 0
    %11 = vsyncpa [#allocation9], 0
    %s12 = scalar_lea.sflag [#allocation9], 1
    %13 = vsyncpa %s12, 0
    %14 = vsyncpa [#allocation7], 0
    %s15 = scalar_lea.sflag [#allocation7], 1
    %16 = vsyncpa %s15, 0
    loop: start=0, step=1, limit=4
    $region2: #{tpu_custom_call.1} parent=1 // loop_pre_header
      _
    $region3: #{tpu_custom_call.1} parent=1 // loop_header
      %s18 = sphi 0, %s22
      %p19 = scmp.ge.s32.totalorder %s18, 4
      %s25 = sphi 0, %s44
      %s26 = sphi 0, %s40
      %s27 = sphi 0, %s36
      %s28 = sphi 0, %s25
      %s29 = sphi 0, %s26
      %s30 = sphi 0, %s27
      %s31 = sphi 0, %s28
      %s32 = sphi 0, %s29
      %s33 = sphi 0, %s30
      %s49 = sphi 0, %s51
      %s52 = sphi 0, %s49
      %s53 = sphi 0, %s52
      %s69 = sphi 0, %s53
      %s77 = sphi 0, %s79
      %s80 = sphi 0, %s77
      %s81 = sphi 0, %s80
      %s97 = sphi 0, %s81
      %s105 = sphi 0, %s107
      %s108 = sphi 0, %s105
      %s109 = sphi 0, %s108
      %s125 = sphi 0, %s109
      %s133 = sphi 0, %s135
      %s136 = sphi 0, %s133
      %s137 = sphi 0, %s136
      %s153 = sphi 0, %s137
    $region4: #{tpu_custom_call.1} parent=1 // loop_header_branch
      %21 = sbr.rel (%p19) target = $region8
    $region5: #{tpu_custom_call.1} parent=1 // loop_body
      %s23 = ssub.s32 %s18, 1
      %s24 = ssub.s32 %s18, 2
      %s34 = sadd.s32 1, %s27
      %p35 = scmp.ge.s32.totalorder %s34, 1
      %s36 = scalar_select %p35, 0, %s34
      %s37 = sadd.s32 1, %s26
      %s38 = scalar_select %p35, %s37, %s26
      %p39 = scmp.ge.s32.totalorder %s38, 1
      %s40 = scalar_select %p39, 0, %s38
      %s41 = sadd.s32 1, %s25
      %s42 = scalar_select %p39, %s41, %s25
      %p43 = scmp.ge.s32.totalorder %s42, 2
      %s44 = scalar_select %p43, 0, %s42
      %s45 = ssub.s32 %s25, %s44
      %s46 = ssub.s32 %s26, %s40
      %s47 = sor.u32 %s45, %s46
      %p48 = scmp.eq.s32.totalorder %s47, 0
      %s50 = sadd.s32 %s49, 1
      %s51 = scalar_select %p48, %s49, %s50
      %p54 = pneg %p48
      %p55 = scmp.eq.s32.totalorder %s18, 1
      %p56 = por %p54, %p55
      %p57 = scmp.ne.s32.totalorder %s49, %s52
      %p58 = scmp.eq.s32.totalorder %s18, 0
      %p59 = por %p57, %p58
      %p60 = scmp.ne.s32.totalorder %s49, %s52
      %p61 = scmp.eq.s32.totalorder %s23, 1
      %p62 = por %p60, %p61
      %p63 = scmp.ne.s32.totalorder %s52, %s53
      %p64 = scmp.eq.s32.totalorder %s23, 0
      %p65 = por %p63, %p64
      %p66 = scmp.ne.s32.totalorder %s52, %s53
      %p67 = scmp.eq.s32.totalorder %s24, 1
      %p68 = por %p66, %p67
      %p70 = scmp.ne.s32.totalorder %s53, %s69
      %p71 = scmp.eq.s32.totalorder %s24, 0
      %p72 = por %p70, %p71
      %s73 = ssub.s32 %s25, %s44
      %s74 = ssub.s32 %s27, %s36
      %s75 = sor.u32 %s73, %s74
      %p76 = scmp.eq.s32.totalorder %s75, 0
      %s78 = sadd.s32 %s77, 1
      %s79 = scalar_select %p76, %s77, %s78
      %p82 = pneg %p76
      %p83 = scmp.eq.s32.totalorder %s18, 1
      %p84 = por %p82, %p83
      %p85 = scmp.ne.s32.totalorder %s77, %s80
      %p86 = scmp.eq.s32.totalorder %s18, 0
      %p87 = por %p85, %p86
      %p88 = scmp.ne.s32.totalorder %s77, %s80
      %p89 = scmp.eq.s32.totalorder %s23, 1
      %p90 = por %p88, %p89
      %p91 = scmp.ne.s32.totalorder %s80, %s81
      %p92 = scmp.eq.s32.totalorder %s23, 0
      %p93 = por %p91, %p92
      %p94 = scmp.ne.s32.totalorder %s80, %s81
      %p95 = scmp.eq.s32.totalorder %s24, 1
      %p96 = por %p94, %p95
      %p98 = scmp.ne.s32.totalorder %s81, %s97
      %p99 = scmp.eq.s32.totalorder %s24, 0
      %p100 = por %p98, %p99
      %s101 = ssub.s32 %s25, %s44
      %s102 = ssub.s32 %s27, %s36
      %s103 = sor.u32 %s101, %s102
      %p104 = scmp.eq.s32.totalorder %s103, 0
      %s106 = sadd.s32 %s105, 1
      %s107 = scalar_select %p104, %s105, %s106
      %p110 = pneg %p104
      %p111 = scmp.eq.s32.totalorder %s18, 1
      %p112 = por %p110, %p111
      %p113 = scmp.ne.s32.totalorder %s105, %s108
      %p114 = scmp.eq.s32.totalorder %s18, 0
      %p115 = por %p113, %p114
      %p116 = scmp.ne.s32.totalorder %s105, %s108
      %p117 = scmp.eq.s32.totalorder %s23, 1
      %p118 = por %p116, %p117
      %p119 = scmp.ne.s32.totalorder %s108, %s109
      %p120 = scmp.eq.s32.totalorder %s23, 0
      %p121 = por %p119, %p120
      %p122 = scmp.ne.s32.totalorder %s108, %s109
      %p123 = scmp.eq.s32.totalorder %s24, 1
      %p124 = por %p122, %p123
      %p126 = scmp.ne.s32.totalorder %s109, %s125
      %p127 = scmp.eq.s32.totalorder %s24, 0
      %p128 = por %p126, %p127
      %s129 = ssub.s32 %s25, %s44
      %s130 = ssub.s32 %s26, %s40
      %s131 = sor.u32 %s129, %s130
      %p132 = scmp.eq.s32.totalorder %s131, 0
      %s134 = sadd.s32 %s133, 1
      %s135 = scalar_select %p132, %s133, %s134
      %p138 = pneg %p132
      %p139 = scmp.eq.s32.totalorder %s18, 1
      %p140 = por %p138, %p139
      %p141 = scmp.ne.s32.totalorder %s133, %s136
      %p142 = scmp.eq.s32.totalorder %s18, 0
      %p143 = por %p141, %p142
      %p144 = scmp.ne.s32.totalorder %s133, %s136
      %p145 = scmp.eq.s32.totalorder %s23, 1
      %p146 = por %p144, %p145
      %p147 = scmp.ne.s32.totalorder %s136, %s137
      %p148 = scmp.eq.s32.totalorder %s23, 0
      %p149 = por %p147, %p148
      %p150 = scmp.ne.s32.totalorder %s136, %s137
      %p151 = scmp.eq.s32.totalorder %s24, 1
      %p152 = por %p150, %p151
      %p154 = scmp.ne.s32.totalorder %s137, %s153
      %p155 = scmp.eq.s32.totalorder %s24, 0
      %p156 = por %p154, %p155
      %p157 = scmp.le.s32.totalorder 1, %s18
      %p158 = scmp.lt.s32.totalorder %s18, 3
      %p159 = pnand %p157, %p158
      %p160 = pneg %p159
      // Predicated region
      $region9: #{tpu_custom_call.1} parent=5 // pred_check
        _
      $region10: #{tpu_custom_call.1} parent=5 // pred_check_branch
        %162 = sbr.rel (%p159) target = $region12
      $region11: #{tpu_custom_call.1} parent=5 // pred_region
        %s163 = ssub.s32 %s18, 1
      $region12: #{tpu_custom_call.1} parent=5 // pred_fallthru
        _
      %p164 = scmp.lt.s32.totalorder %s18, 2
      // Predicated region
      $region13: #{tpu_custom_call.1} parent=5 // pred_check
        %p165 = pneg %p164
      $region14: #{tpu_custom_call.1} parent=5 // pred_check_branch
        %167 = sbr.rel (%p165) target = $region16
      $region15: #{tpu_custom_call.1} parent=5 // pred_region
        // Predicated region
        $region17: #{tpu_custom_call.1} parent=15 // pred_check
          %p168 = pneg %p59
        $region18: #{tpu_custom_call.1} parent=15 // pred_check_branch
          %170 = sbr.rel (%p168) target = $region20
        $region19: #{tpu_custom_call.1} parent=15 // pred_region
          %s171 = sand.u32 %s49, 1
          %s172 = scalar_lea.sflag [#allocation6], %s171
          %s173 = sand.u32 %s49, 1
          %s174 = smul.addr %s173, 8
          %s175 = scalar_lea.vmem [#allocation5], %s174
          %s177 = ssub.s32 128, 128
          %178 = vsyncadd %s172, %s177
          %s179 = sadd.s32 %s26, %s25
          %s180 = smul.addr %s179, 128
          %s181 = scalar_lea.hbm %s0, %s180
          %s183 = sshll.u32 %s175, 4
          %s184 = int_to_ptr.vmem [resolvable:$true] %s183
          %186 = dma.hbm_to_vmem [thread:$0]  %s181, 128, %s184, %s172
        $region20: #{tpu_custom_call.1} parent=15 // pred_fallthru
          _
        // Predicated region
        $region21: #{tpu_custom_call.1} parent=15 // pred_check
          %p187 = pneg %p87
        $region22: #{tpu_custom_call.1} parent=15 // pred_check_branch
          %189 = sbr.rel (%p187) target = $region24
        $region23: #{tpu_custom_call.1} parent=15 // pred_region
          %s190 = sand.u32 %s18, 1
          %s191 = scalar_lea.sflag [#allocation9], %s190
          %s192 = sand.u32 %s77, 1
          %s193 = smul.addr %s192, 8
          %s194 = scalar_lea.vmem [#allocation8], %s193
          %s196 = ssub.s32 128, 128
          %197 = vsyncadd %s191, %s196
          %s198 = sadd.s32 %s27, %s25
          %s199 = smul.addr %s198, 128
          %s200 = scalar_lea.hbm %s1, %s199
          %s202 = sshll.u32 %s194, 4
          %s203 = int_to_ptr.vmem [resolvable:$true] %s202
          %205 = dma.hbm_to_vmem [thread:$0]  %s200, 128, %s203, %s191
        $region24: #{tpu_custom_call.1} parent=15 // pred_fallthru
          _
        // Predicated region
        $region25: #{tpu_custom_call.1} parent=15 // pred_check
          %p206 = pneg %p115
        $region26: #{tpu_custom_call.1} parent=15 // pred_check_branch
          %208 = sbr.rel (%p206) target = $region28
        $region27: #{tpu_custom_call.1} parent=15 // pred_region
          %s209 = sand.u32 %s18, 1
          %s210 = scalar_lea.sflag [#allocation9], %s209
          %s211 = sand.u32 %s105, 1
          %s212 = smul.addr %s211, 8
          %s213 = scalar_lea.vmem [#allocation10], %s212
          %s215 = ssub.s32 128, 128
          %216 = vsyncadd %s210, %s215
          %s217 = sadd.s32 %s27, %s25
          %s218 = smul.addr %s217, 128
          %s219 = scalar_lea.hbm %s2, %s218
          %s221 = sshll.u32 %s213, 4
          %s222 = int_to_ptr.vmem [resolvable:$true] %s221
          %224 = dma.hbm_to_vmem [thread:$0]  %s219, 128, %s222, %s210
        $region28: #{tpu_custom_call.1} parent=15 // pred_fallthru
          _
      $region16: #{tpu_custom_call.1} parent=5 // pred_fallthru
        _
      %p225 = scmp.le.s32.totalorder 1, %s18
      %p226 = scmp.lt.s32.totalorder %s18, 3
      %p227 = pnand %p225, %p226
      %p228 = pneg %p227
      // Predicated region
      $region29: #{tpu_custom_call.1} parent=5 // pred_check
        _
      $region30: #{tpu_custom_call.1} parent=5 // pred_check_branch
        %230 = sbr.rel (%p227) target = $region32
      $region31: #{tpu_custom_call.1} parent=5 // pred_region
        %s231 = ssub.s32 %s18, 1
        %s232 = sand.u32 %s52, 1
        %s233 = scalar_lea.sflag [#allocation6], %s232
        %s234 = sand.u32 %s52, 1
        %s235 = smul.addr %s234, 8
        %s236 = scalar_lea.vmem [#allocation5], %s235
        // Predicated region
        $region33: #{tpu_custom_call.1} parent=31 // pred_check
          %p237 = pneg %p65
        $region34: #{tpu_custom_call.1} parent=31 // pred_check_branch
          %239 = sbr.rel (%p237) target = $region36
        $region35: #{tpu_custom_call.1} parent=31 // pred_region
          %240 = dma.done %s233, 128
        $region36: #{tpu_custom_call.1} parent=31 // pred_fallthru
          _
        %s241 = sand.u32 %s23, 1
        %s242 = scalar_lea.sflag [#allocation9], %s241
        %s243 = sand.u32 %s80, 1
        %s244 = smul.addr %s243, 8
        %s245 = scalar_lea.vmem [#allocation8], %s244
        // Predicated region
        $region37: #{tpu_custom_call.1} parent=31 // pred_check
          %p246 = pneg %p93
        $region38: #{tpu_custom_call.1} parent=31 // pred_check_branch
          %248 = sbr.rel (%p246) target = $region40
        $region39: #{tpu_custom_call.1} parent=31 // pred_region
          %249 = dma.done %s242, 128
        $region40: #{tpu_custom_call.1} parent=31 // pred_fallthru
          _
        %s250 = sand.u32 %s23, 1
        %s251 = scalar_lea.sflag [#allocation9], %s250
        %s252 = sand.u32 %s108, 1
        %s253 = smul.addr %s252, 8
        %s254 = scalar_lea.vmem [#allocation10], %s253
        // Predicated region
        $region41: #{tpu_custom_call.1} parent=31 // pred_check
          %p255 = pneg %p121
        $region42: #{tpu_custom_call.1} parent=31 // pred_check_branch
          %257 = sbr.rel (%p255) target = $region44
        $region43: #{tpu_custom_call.1} parent=31 // pred_region
          %258 = dma.done %s251, 128
        $region44: #{tpu_custom_call.1} parent=31 // pred_fallthru
          _
        %s259 = sand.u32 %s52, 1
        %s260 = scalar_lea.sflag [#allocation6], %s259
        %s261 = sand.u32 %s52, 1
        %s262 = smul.addr %s261, 8
        %s263 = scalar_lea.vmem [#allocation5], %s262
        %p264 = pneg %p65
        %p265 = pneg %p62
        %s266 = sand.u32 %s23, 1
        %s267 = scalar_lea.sflag [#allocation9], %s266
        %s268 = sand.u32 %s80, 1
        %s269 = smul.addr %s268, 8
        %s270 = scalar_lea.vmem [#allocation8], %s269
        %p271 = pneg %p93
        %p272 = pneg %p90
        %s273 = sand.u32 %s23, 1
        %s274 = scalar_lea.sflag [#allocation9], %s273
        %s275 = sand.u32 %s108, 1
        %s276 = smul.addr %s275, 8
        %s277 = scalar_lea.vmem [#allocation10], %s276
        %p278 = pneg %p121
        %p279 = pneg %p118
        %p280 = pneg %p149
        %p281 = pneg %p146
        %s282 = sand.u32 %s136, 1
        %s283 = scalar_lea.sflag [#allocation7], %s282
        %s284 = sand.u32 %s136, 1
        %s285 = smul.addr %s284, 8
        %s286 = scalar_lea.vmem [#allocation11], %s285
        %p287 = scmp.eq.s32.totalorder %s30, 0
        // Predicated region
        $region45: #{tpu_custom_call.1} parent=31 // pred_check
          %p288 = pneg %p287
        $region46: #{tpu_custom_call.1} parent=31 // pred_check_branch
          %290 = sbr.rel (%p288) target = $region48
        $region47: #{tpu_custom_call.1} parent=31 // pred_region
          %vm291 = vcmask 7168
          %292 = vst.msk [vmem:[#allocation2] sm:$0xff] %vm291, -inf
          %293 = vst.msk [vmem:[#allocation3] sm:$0xff] %vm291, 0.0
          %294 = vst [vmem:[#allocation4] sm:$0xff] 0.0
        $region48: #{tpu_custom_call.1} parent=31 // pred_fallthru
          _
        %v295 = vld [vmem:[%s236] sm:$0xff]
        %v296 = vmul.f32 %v295, 0.17677669
        %v297 = vld [vmem:[%s245] sm:$0xff]
        %v298 = vld [vmem:[%s254] sm:$0xff]
        %299 = vmatprep.subr.mxu0 0.0
        %300 = vmatpush1.xpose.msra.mxu0 0.0
        %301 = vmatprep.subr.mxu0 0.0
        %302 = vmatpush1.xpose.msra.mxu0 0.0
        %303 = vmatprep.subr.mxu0 0.0
        %304 = vmatpush1.xpose.msra.mxu0 0.0
        %305 = vmatprep.subr.mxu0 0.0
        %306 = vmatpush1.xpose.msra.mxu0 0.0
        %307 = vmatprep.subr.mxu0 0.0
        %308 = vmatpush1.xpose.msra.mxu0 0.0
        %309 = vmatprep.subr.mxu0 0.0
        %310 = vmatpush1.xpose.msra.mxu0 0.0
        %311 = vmatprep.subr.mxu0 0.0
        %312 = vmatpush1.xpose.msra.mxu0 0.0
        %313 = vmatprep.subr.mxu0 0.0
        %314 = vmatpush1.xpose.msra.mxu0 0.0
        %315 = vmatprep.subr.mxu0 0.0
        %316 = vmatpush1.xpose.msra.mxu0 0.0
        %317 = vmatprep.subr.mxu0 0.0
        %318 = vmatpush1.xpose.msra.mxu0 0.0
        %319 = vmatprep.subr.mxu0 0.0
        %320 = vmatpush1.xpose.msra.mxu0 0.0
        %321 = vmatprep.subr.mxu0 0.0
        %322 = vmatpush1.xpose.msra.mxu0 0.0
        %323 = vmatprep.subr.mxu0 0.0
        %324 = vmatpush1.xpose.msra.mxu0 0.0
        %325 = vmatprep.subr.mxu0 0.0
        %326 = vmatpush1.xpose.msra.mxu0 0.0
        %327 = vmatprep.subr.mxu0 0.0
        %328 = vmatpush1.xpose.msra.mxu0 0.0
        %329 = vmatprep.subr.mxu0 0.0
        %330 = vmatpush1.xpose.msra.mxu0 %v297
        %331 = vmatprep.subr.mxu0 0.0
        %332 = vmatpush2.xpose.msra.mxu0 0.0
        %333 = vmatprep.subr.mxu0 0.0
        %334 = vmatpush2.xpose.msra.mxu0 0.0
        %335 = vmatprep.subr.mxu0 0.0
        %336 = vmatpush2.xpose.msra.mxu0 0.0
        %337 = vmatprep.subr.mxu0 0.0
        %338 = vmatpush2.xpose.msra.mxu0 0.0
        %339 = vmatprep.subr.mxu0 0.0
        %340 = vmatpush2.xpose.msra.mxu0 0.0
        %341 = vmatprep.subr.mxu0 0.0
        %342 = vmatpush2.xpose.msra.mxu0 0.0
        %343 = vmatprep.subr.mxu0 0.0
        %344 = vmatpush2.xpose.msra.mxu0 0.0
        %345 = vmatprep.subr.mxu0 0.0
        %346 = vmatpush2.xpose.msra.mxu0 0.0
        %347 = vmatprep.subr.mxu0 0.0
        %348 = vmatpush2.xpose.msra.mxu0 0.0
        %349 = vmatprep.subr.mxu0 0.0
        %350 = vmatpush2.xpose.msra.mxu0 0.0
        %351 = vmatprep.subr.mxu0 0.0
        %352 = vmatpush2.xpose.msra.mxu0 0.0
        %353 = vmatprep.subr.mxu0 0.0
        %354 = vmatpush2.xpose.msra.mxu0 0.0
        %355 = vmatprep.subr.mxu0 0.0
        %356 = vmatpush2.xpose.msra.mxu0 0.0
        %357 = vmatprep.subr.mxu0 0.0
        %358 = vmatpush2.xpose.msra.mxu0 0.0
        %359 = vmatprep.subr.mxu0 0.0
        %360 = vmatpush2.xpose.msra.mxu0 0.0
        %361 = vmatprep.subr.mxu0 0.0
        %362 = vmatpush2.xpose.msra.mxu0 0.0
        %363 = vmatprep.mubr.f32.mxu0 0.0
        %364 = vmatmul.mubr.f32.gmra.mxu0 %v296
        %v365 = vpop.f32.mrf.mxu0
        %v366 = vadd.f32 0.0, %v365
        %v367 = vpop.f32.mrf.mxu0
        %368 = vdwg.mxu0
        %v369 = vld [vmem:[#allocation2] sm:$0xff]
        %vm370 = vcmask 64512
        %v371 = vsel %vm370, %v366, -inf
        %372 = vmax.xlane.f32.xlu0 %v371
        %v373 = vpop.xlane.xlu0 %372
        %v374 = vmax.f32 %v369, %v373
        %v375 = vsub.f32 %v369, %v374
        %v376 = vmul.f32 %v375, 1.442695
        %v377 = vpow.pop %v376
        %379 = vset.pattern.permute.xlu0 0
        %380 = vperm.xlu0 %379, %v374
        %v381 = vpop.permute.xlu0 %380
        %v383 = vsub.f32 %v366, %v381
        %v384 = vmul.f32 %v383, 1.442695
        %v385 = vpow.pop %v384
        %v386 = vld [vmem:[#allocation3] sm:$0xff]
        %v387 = vmul.f32 %v377, %v386
        %v388 = vsel %vm370, %v385, 0.0
        %389 = vadd.xlane.f32.xlu0 %v388
        %v390 = vpop.xlane.xlu0 %389
        %v391 = vadd.f32 %v387, %v390
        %vm392 = vcmask 7168
        %393 = vst.msk [vmem:[#allocation3] sm:$0xff] %vm392, %v391
        %v394 = vld [vmem:[#allocation4] sm:$0xff]
        %396 = vset.pattern.permute.xlu0 0
        %397 = vperm.xlu0 %396, %v377
        %v398 = vpop.permute.xlu0 %397
        %v400 = vmul.f32 %v398, %v394
        %v402 = vsel %vm370, %v385, 0
        %404 = vmatprep.subr.mxu0 0.0
        %405 = vmatpush1.msra.mxu0 0.0
        %406 = vmatprep.subr.mxu0 0.0
        %407 = vmatpush1.msra.mxu0 0.0
        %408 = vmatprep.subr.mxu0 0.0
        %409 = vmatpush1.msra.mxu0 0.0
        %410 = vmatprep.subr.mxu0 0.0
        %411 = vmatpush1.msra.mxu0 0.0
        %412 = vmatprep.subr.mxu0 0.0
        %413 = vmatpush1.msra.mxu0 0.0
        %414 = vmatprep.subr.mxu0 0.0
        %415 = vmatpush1.msra.mxu0 0.0
        %416 = vmatprep.subr.mxu0 0.0
        %417 = vmatpush1.msra.mxu0 0.0
        %418 = vmatprep.subr.mxu0 0.0
        %419 = vmatpush1.msra.mxu0 0.0
        %420 = vmatprep.subr.mxu0 0.0
        %421 = vmatpush1.msra.mxu0 0.0
        %422 = vmatprep.subr.mxu0 0.0
        %423 = vmatpush1.msra.mxu0 0.0
        %424 = vmatprep.subr.mxu0 0.0
        %425 = vmatpush1.msra.mxu0 0.0
        %426 = vmatprep.subr.mxu0 0.0
        %427 = vmatpush1.msra.mxu0 0.0
        %428 = vmatprep.subr.mxu0 0.0
        %429 = vmatpush1.msra.mxu0 0.0
        %430 = vmatprep.subr.mxu0 0.0
        %431 = vmatpush1.msra.mxu0 0.0
        %432 = vmatprep.subr.mxu0 0.0
        %433 = vmatpush1.msra.mxu0 0.0
        %434 = vmatprep.subr.mxu0 0.0
        %435 = vmatpush1.msra.mxu0 %v298
        %436 = vmatprep.subr.mxu0 0.0
        %437 = vmatpush2.msra.mxu0 0.0
        %438 = vmatprep.subr.mxu0 0.0
        %439 = vmatpush2.msra.mxu0 0.0
        %440 = vmatprep.subr.mxu0 0.0
        %441 = vmatpush2.msra.mxu0 0.0
        %442 = vmatprep.subr.mxu0 0.0
        %443 = vmatpush2.msra.mxu0 0.0
        %444 = vmatprep.subr.mxu0 0.0
        %445 = vmatpush2.msra.mxu0 0.0
        %446 = vmatprep.subr.mxu0 0.0
        %447 = vmatpush2.msra.mxu0 0.0
        %448 = vmatprep.subr.mxu0 0.0
        %449 = vmatpush2.msra.mxu0 0.0
        %450 = vmatprep.subr.mxu0 0.0
        %451 = vmatpush2.msra.mxu0 0.0
        %452 = vmatprep.subr.mxu0 0.0
        %453 = vmatpush2.msra.mxu0 0.0
        %454 = vmatprep.subr.mxu0 0.0
        %455 = vmatpush2.msra.mxu0 0.0
        %456 = vmatprep.subr.mxu0 0.0
        %457 = vmatpush2.msra.mxu0 0.0
        %458 = vmatprep.subr.mxu0 0.0
        %459 = vmatpush2.msra.mxu0 0.0
        %460 = vmatprep.subr.mxu0 0.0
        %461 = vmatpush2.msra.mxu0 0.0
        %462 = vmatprep.subr.mxu0 0.0
        %463 = vmatpush2.msra.mxu0 0.0
        %464 = vmatprep.subr.mxu0 0.0
        %465 = vmatpush2.msra.mxu0 0.0
        %466 = vmatprep.subr.mxu0 0.0
        %467 = vmatpush2.msra.mxu0 0.0
        %468 = vmatprep.mubr.f32.mxu0 0.0
        %469 = vmatmul.mubr.f32.gmra.mxu0 %v402
        %v470 = vpop.f32.mrf.mxu0
        %v471 = vadd.f32 0.0, %v470
        %v472 = vpop.f32.mrf.mxu0
        %473 = vdwg.mxu0
        %v474 = vadd.f32 %v400, %v471
        %475 = vst [vmem:[#allocation4] sm:$0xff] %v474
        %476 = vst.msk [vmem:[#allocation2] sm:$0xff] %vm392, %v374
        // Predicated region
        $region49: #{tpu_custom_call.1} parent=31 // pred_check
          %p477 = pneg %p287
        $region50: #{tpu_custom_call.1} parent=31 // pred_check_branch
          %479 = sbr.rel (%p477) target = $region52
        $region51: #{tpu_custom_call.1} parent=31 // pred_region
          %v480 = vld [vmem:[#allocation3] sm:$0xff]
          %v481 = vrcp.pop %v480
          %v482 = vld [vmem:[#allocation4] sm:$0xff]
          %484 = vset.pattern.permute.xlu0 0
          %485 = vperm.xlu0 %484, %v481
          %v486 = vpop.permute.xlu0 %485
          %v488 = vmul.f32 %v482, %v486
          %489 = vst [vmem:[%s286] sm:$0xff] %v488
        $region52: #{tpu_custom_call.1} parent=31 // pred_fallthru
          _
        %s490 = sand.u32 %s136, 1
        %s491 = scalar_lea.sflag [#allocation7], %s490
        %s492 = sand.u32 %s136, 1
        %s493 = smul.addr %s492, 8
        %s494 = scalar_lea.vmem [#allocation11], %s493
        // Predicated region
        $region53: #{tpu_custom_call.1} parent=31 // pred_check
          %p495 = pneg %p146
        $region54: #{tpu_custom_call.1} parent=31 // pred_check_branch
          %497 = sbr.rel (%p495) target = $region56
        $region55: #{tpu_custom_call.1} parent=31 // pred_region
          %s499 = ssub.s32 128, 128
          %500 = vsyncadd %s491, %s499
          %s501 = sadd.s32 %s29, %s28
          %s502 = smul.addr %s501, 128
          %s503 = scalar_lea.hbm %s3, %s502
          %s505 = sshll.u32 %s494, 4
          %s506 = int_to_ptr.vmem [resolvable:$true] %s505
          %508 = dma.vmem_to_hbm [thread:$0]  %s506, 128, %s503, %s491
        $region56: #{tpu_custom_call.1} parent=31 // pred_fallthru
          _
      $region32: #{tpu_custom_call.1} parent=5 // pred_fallthru
        _
      %p509 = scmp.le.s32.totalorder 2, %s18
      // Predicated region
      $region57: #{tpu_custom_call.1} parent=5 // pred_check
        %p510 = pneg %p509
      $region58: #{tpu_custom_call.1} parent=5 // pred_check_branch
        %512 = sbr.rel (%p510) target = $region60
      $region59: #{tpu_custom_call.1} parent=5 // pred_region
        %s513 = ssub.s32 %s18, 2
        // Predicated region
        $region61: #{tpu_custom_call.1} parent=59 // pred_check
          %p514 = pneg %p152
        $region62: #{tpu_custom_call.1} parent=59 // pred_check_branch
          %516 = sbr.rel (%p514) target = $region64
        $region63: #{tpu_custom_call.1} parent=59 // pred_region
          %s517 = sand.u32 %s137, 1
          %s518 = scalar_lea.sflag [#allocation7], %s517
          %s519 = sand.u32 %s137, 1
          %s520 = smul.addr %s519, 8
          %s521 = scalar_lea.vmem [#allocation11], %s520
          %522 = dma.done %s518, 128
        $region64: #{tpu_custom_call.1} parent=59 // pred_fallthru
          _
      $region60: #{tpu_custom_call.1} parent=5 // pred_fallthru
        _
    $region6: #{tpu_custom_call.1} parent=1 // loop_footer
      %s22 = sadd.s32 1, %s18
    $region7: #{tpu_custom_call.1} parent=1 // loop_footer_branch
      %17 = sbr.rel target = $region3
    $region8: #{tpu_custom_call.1} parent=1 // loop_exit
      _
    %523 = vsyncpa [#allocation6], 1
    %s524 = scalar_lea.sflag [#allocation6], 1
    %525 = vsyncpa %s524, 1
    %526 = vsyncpa [#allocation9], 1
    %s527 = scalar_lea.sflag [#allocation9], 1
    %528 = vsyncpa %s527, 1
    %529 = vsyncpa [#allocation7], 1
    %s530 = scalar_lea.sflag [#allocation7], 1
    %531 = vsyncpa %s530, 1

</llo_original>
